<compile_context>
chip_gen: v7x
topology: tpu7x:2x2x1
jax: 0.10.0
libtpu: 0.0.40
codegen_flags: <defaults>
</compile_context>

<pallas_src>
import math
from functools import partial

import jax
import jax.numpy as jnp
from jax import lax
from jax.experimental import pallas as pl
from jax.experimental.pallas import tpu as pltpu


def _round_up(a, m):
    return ((a + m - 1) // m) * m


def _nce_dense_kernel(params_ref, x_ref, mem_ref, o_ref, *, dot_dtype):
    """params (SMEM f32[4]); x tile (TILE_B, D); memory tile (TILE_N, D)."""
    T = params_ref[1]
    inv_T = 1.0 / T                        # scalar; stays off the vector path
    eps2 = jnp.float32(1e-12 * 1e-12)      # F.normalize eps=1e-12, clamp on sum-sq

    x = x_ref[...]                                             # (TILE_B, D) f32
    xn = x * lax.rsqrt(jnp.maximum(
        jnp.sum(x * x, axis=-1, keepdims=True), eps2))         # EUP rsqrt + VPU mul

    m = mem_ref[...]                                           # (TILE_N, D) f32
    mn = m * lax.rsqrt(jnp.maximum(
        jnp.sum(m * m, axis=-1, keepdims=True), eps2))

    # (TILE_B, D) . (TILE_N, D)^T -> (TILE_B, TILE_N); contraction over D (MXU).
    s = lax.dot_general(
        xn.astype(dot_dtype), mn.astype(dot_dtype),
        (((1,), (1,)), ((), ())),
        preferred_element_type=jnp.float32)

    o_ref[...] = jnp.exp(s * inv_T)                            # lane-dense store


def nce_average_forward(x, y, memory, idx, params, *,
                        tile_b=None, tile_n=None, dot_dtype=jnp.float32):
    """Functional equivalent of NCEFunction.forward (Z recomputed when < 0)."""
    B, D = x.shape
    K1 = idx.shape[1]                     # K + 1
    output_size, D_m = memory.shape
    assert D == D_m

    # idx.select(1, 0).copy_(y)
    idx = idx.at[:, 0].set(y).astype(jnp.int32)

    # --- tile sizing ------------------------------------------------------
    # VMEM per step ~ 2 (double buffer) * 4B * (TILE_B*D + TILE_N*D + TILE_B*TILE_N).
    # Keep it well under the 32 MiB scoped limit on every generation.
    TILE_B = tile_b or min(128, _round_up(B, 8))
    budget = 24 * 1024 * 1024
    fixed = 2 * 4 * TILE_B * D                         # resident x tile (double-buffered)
    per_n = 2 * 4 * (D + TILE_B)                       # mem tile + out tile, per bank column
    max_tile_n = max(128, ((budget - fixed) // max(per_n, 1)) // 128 * 128)
    TILE_N = tile_n or min(1024, max_tile_n, _round_up(output_size, 128))
    B_pad = _round_up(B, TILE_B)
    N_pad = _round_up(output_size, TILE_N)

    x_p = x if B_pad == B else jnp.pad(x, ((0, B_pad - B), (0, 0)))
    mem_p = (memory if N_pad == output_size
             else jnp.pad(memory, ((0, N_pad - output_size), (0, 0))))

    n_bank_tiles = N_pad // TILE_N
    cost = pl.CostEstimate(
        flops=2 * B_pad * N_pad * D,
        transcendentals=B_pad * N_pad,                 # exp
        bytes_accessed=4 * (B_pad * D * n_bank_tiles   # x re-read per bank tile (resident)
                            + N_pad * D * (B_pad // TILE_B)
                            + B_pad * N_pad))

    s_exp = pl.pallas_call(
        partial(_nce_dense_kernel, dot_dtype=dot_dtype),
        out_shape=jax.ShapeDtypeStruct((B_pad, N_pad), jnp.float32),
        grid=(B_pad // TILE_B, N_pad // TILE_N),       # bank axis innermost: x stays resident
        in_specs=[
            pl.BlockSpec(memory_space=pltpu.MemorySpace.SMEM),    # params (4,)
            pl.BlockSpec((TILE_B, D), lambda i, j: (i, 0)),       # x batch tile
            pl.BlockSpec((TILE_N, D), lambda i, j: (j, 0)),       # memory bank tile
        ],
        out_specs=pl.BlockSpec((TILE_B, TILE_N), lambda i, j: (i, j)),
        compiler_params=pltpu.CompilerParams(
            dimension_semantics=("parallel", "parallel"),
            vmem_limit_bytes=32 * 1024 * 1024),
        cost_estimate=cost,
    )(params.astype(jnp.float32), x_p, mem_p)

    # Cheap (B, K+1)-element gather of the needed similarities.
    out_unnorm = jnp.take_along_axis(s_exp[:B], idx, axis=1)

    # Z handling: if params[2] < 0, Z = out.mean() * outputSize.
    Z_param = params[2]
    Z = jnp.where(Z_param < 0, jnp.mean(out_unnorm) * output_size, Z_param)
    out = out_unnorm / Z
    new_params = params.at[2].set(Z)      # mirror PyTorch's params[2] = Z
    return out, Z, new_params


def _reference(x, y, memory, idx, params):
    """Pure-JAX reference mirroring the PyTorch forward."""
    B, D = x.shape
    K1 = idx.shape[1]
    T = params[1]
    idx = idx.at[:, 0].set(y)
    weight = memory[idx.reshape(-1)].reshape(B, K1, D)
    wn = weight / jnp.maximum(
        jnp.linalg.norm(weight, axis=-1, keepdims=True), 1e-12)
    xn = x / jnp.maximum(jnp.linalg.norm(x, axis=-1, keepdims=True), 1e-12)
    out = jnp.exp(jnp.einsum('bkd,bd->bk', wn, xn, precision='highest') / T)
    Z = jnp.mean(out) * memory.shape[0]
    return out / Z


if __name__ == "__main__":
    # Module config (small, deterministic)
    inputSize = 32       # D
    outputSize = 64      # memory bank size
    K = 7                # noise samples -> K+1 = 8
    T = 0.07
    momentum = 0.5
    B = 4                # batch

    key = jax.random.PRNGKey(0)
    k_mem, k_x, k_y, k_idx = jax.random.split(key, 4)

    # memory buffer init: uniform in [-stdv, stdv], stdv = 1/sqrt(inputSize/3)
    stdv = 1.0 / math.sqrt(inputSize / 3)
    memory = jax.random.uniform(
        k_mem, (outputSize, inputSize), jnp.float32, minval=-stdv, maxval=stdv)

    x = jax.random.normal(k_x, (B, inputSize), dtype=jnp.float32)
    y = jax.random.randint(k_y, (B,), 0, outputSize, dtype=jnp.int32)
    # AliasMethod over uniform unigrams == uniform multinomial draw
    idx = jax.random.randint(k_idx, (B, K + 1), 0, outputSize, dtype=jnp.int32)

    params = jnp.array([float(K), T, -1.0, momentum], dtype=jnp.float32)

    out, Z, new_params = nce_average_forward(x, y, memory, idx, params)
    out = jax.block_until_ready(out)

    ref = _reference(x, y, memory, idx, params)
    assert out.shape == (B, K + 1)
    assert jnp.allclose(out, ref, rtol=1e-5, atol=1e-5), "mismatch vs reference"
    assert bool(new_params[2] > 0), "Z was not written back into params"

    print("KERNEL_OK")
</pallas_src>

<mosaic_0001>
module attributes {stable_mosaic.version = 11 : i64} {
  func.func @_nce_dense_kernel(%arg0: i32, %arg1: i32, %arg2: memref<4xf32, #tpu.memory_space<smem>>, %arg3: memref<8x32xf32, #tpu.memory_space<vmem>>, %arg4: memref<128x32xf32, #tpu.memory_space<vmem>>, %arg5: memref<8x128xf32, #tpu.memory_space<vmem>>) attributes {dimension_semantics = [#tpu.dimension_semantics<parallel>, #tpu.dimension_semantics<parallel>], iteration_bounds = array<i64: 1, 1>, scalar_prefetch = 0 : i64, scratch_operands = 0 : i64, tpu.core_type = #tpu.core_type<tc>, window_params = [{transform_indices = @transform_0, window_bounds = array<i64: 4>}, {transform_indices = @transform_1, window_bounds = array<i64: 8, 32>}, {transform_indices = @transform_2, window_bounds = array<i64: 128, 32>}, {transform_indices = @transform_3, window_bounds = array<i64: 8, 128>}]} {
    %c1 = arith.constant 1 : index
    %0 = memref.load %arg2[%c1] : memref<4xf32, #tpu.memory_space<smem>>
    %cst = arith.constant 1.000000e+00 : f32
    %1 = arith.divf %cst, %0 : f32
    %c0 = arith.constant 0 : index
    %c0_0 = arith.constant 0 : index
    %2 = vector.load %arg3[%c0, %c0_0] : memref<8x32xf32, #tpu.memory_space<vmem>>, vector<8x32xf32>
    %3 = arith.mulf %2, %2 : vector<8x32xf32>
    %cst_1 = arith.constant dense<0.000000e+00> : vector<8xf32>
    %4 = vector.multi_reduction <add>, %3, %cst_1 [1] : vector<8x32xf32> to vector<8xf32>
    %5 = vector.shape_cast %4 : vector<8xf32> to vector<8x1xf32>
    %cst_2 = arith.constant 1.000000e-24 : f32
    %6 = vector.broadcast %cst_2 : f32 to vector<8x1xf32>
    %7 = arith.maximumf %5, %6 : vector<8x1xf32>
    %8 = math.rsqrt %7 : vector<8x1xf32>
    %9 = vector.broadcast %8 : vector<8x1xf32> to vector<8x32xf32>
    %10 = arith.mulf %2, %9 : vector<8x32xf32>
    %c0_3 = arith.constant 0 : index
    %c0_4 = arith.constant 0 : index
    %11 = vector.load %arg4[%c0_3, %c0_4] : memref<128x32xf32, #tpu.memory_space<vmem>>, vector<128x32xf32>
    %12 = arith.mulf %11, %11 : vector<128x32xf32>
    %cst_5 = arith.constant dense<0.000000e+00> : vector<128xf32>
    %13 = vector.multi_reduction <add>, %12, %cst_5 [1] : vector<128x32xf32> to vector<128xf32>
    %14 = vector.shape_cast %13 : vector<128xf32> to vector<128x1xf32>
    %cst_6 = arith.constant 1.000000e-24 : f32
    %15 = vector.broadcast %cst_6 : f32 to vector<128x1xf32>
    %16 = arith.maximumf %14, %15 : vector<128x1xf32>
    %17 = math.rsqrt %16 : vector<128x1xf32>
    %18 = vector.broadcast %17 : vector<128x1xf32> to vector<128x32xf32>
    %19 = arith.mulf %11, %18 : vector<128x32xf32>
    %cst_7 = arith.constant dense<0.000000e+00> : vector<8x128xf32>
    %20 = tpu.matmul %10, %19, %cst_7 {dimension_numbers = #tpu.dot_dimension_numbers<[1], [1], [0], [0], [0, 0, 1, 0], [], []>} : vector<8x32xf32>, vector<128x32xf32>, vector<8x128xf32> -> vector<8x128xf32>
    %21 = vector.broadcast %1 : f32 to vector<8x128xf32>
    %22 = arith.mulf %20, %21 : vector<8x128xf32>
    %23 = math.exp %22 : vector<8x128xf32>
    %c0_8 = arith.constant 0 : index
    %c0_9 = arith.constant 0 : index
    %24 = vector.load %arg5[%c0_8, %c0_9] : memref<8x128xf32, #tpu.memory_space<vmem>>, vector<8x128xf32>
    tpu.vector_store %arg5[%c0_8, %c0_9], %23 {strides = array<i32>} : memref<8x128xf32, #tpu.memory_space<vmem>>, vector<8x128xf32>,
    return
  }
  func.func @transform_0(%arg0: i32, %arg1: i32) -> i32 {
    %c0_i32 = arith.constant 0 : i32
    %c0_i32_0 = arith.constant 0 : i32
    return %c0_i32 : i32
  }
  func.func @transform_1(%arg0: i32, %arg1: i32) -> (i32, i32) {
    %c0_i32 = arith.constant 0 : i32
    %c0_i32_0 = arith.constant 0 : i32
    return %arg0, %c0_i32 : i32, i32
  }
  func.func @transform_2(%arg0: i32, %arg1: i32) -> (i32, i32) {
    %c0_i32 = arith.constant 0 : i32
    %c0_i32_0 = arith.constant 0 : i32
    return %arg1, %c0_i32 : i32, i32
  }
  func.func @transform_3(%arg0: i32, %arg1: i32) -> (i32, i32) {
    %c0_i32 = arith.constant 0 : i32
    return %arg0, %arg1 : i32, i32
  }
}

</mosaic_0001>

<llo_original>
// kernel: tpu_custom_call.1
$region0: #{tpu_custom_call.1}
  #allocation0 [shape = 'u32[]', space=smem, size = 0x4, offset = 0x4, fixed_abs, tag = 'smem constant byte address 0x4 - core index']
  #allocation1 [shape = 'u32[144,128]{1,0:T(1,128)}', space=vmem, size = 0x12000, scoped, tag = 'internal scratch']
  %s0 = inlined_call_operand.vmem [shape: f32[4], index: 0, kind: input, shape index: {}]
  %s1 = inlined_call_operand.vmem [shape: f32[8,32], index: 1, kind: input, shape index: {}]
  %s2 = inlined_call_operand.vmem [shape: f32[128,32], index: 2, kind: input, shape index: {}]
  %s3 = inlined_call_operand.hbm [shape: f32[8,128], index: 3, kind: output, shape index: {}]
  %s4 = sld [smem:[#allocation0]]
  $region26: #{tpu_custom_call.1} parent=0
    _
  %s6 = ssub.s32 1, %s4
  %s7 = scalar_select 0, %s6, %s4
  $region1: #{tpu_custom_call.1} parent=0
    #allocation2 [shape = 'u8[512]{0}', space=smem, size = 0x200, scoped, tag = 'input window, operand 0, single buffered']
    #allocation3 [shape = 's32[1]{0}', space=sflag, size = 0x4, scoped, tag = 'scoped memory for tpu_custom_call.1']
    #allocation4 [shape = 's32[1]{0}', space=sflag, size = 0x4, scoped, tag = 'scoped memory for tpu_custom_call.1']
    #allocation5 [shape = 'u8[4096]{0}', space=vmem, size = 0x1000, scoped, tag = 'output window, operand 0, single buffered']
    %8 = vsyncpa [#allocation4], 0
    %9 = vsyncpa [#allocation3], 0
    // Predicated region
    $region2: #{tpu_custom_call.1} parent=1 // pred_check
      _
    $region3: #{tpu_custom_call.1} parent=1 // pred_check_branch
      %11 = sbr.rel (0) target = $region5
    $region4: #{tpu_custom_call.1} parent=1 // pred_region
      %s13 = ssub.s32 16, 16
      %14 = vsyncadd [#allocation4], %s13
      %s16 = sshll.u32 %s0, 4
      %s17 = int_to_ptr.vmem [resolvable:$true] %s16
      %19 = dma.vmem_to_smem %s17, 16, [#allocation2], [#allocation4]
    $region5: #{tpu_custom_call.1} parent=1 // pred_fallthru
      _
    // Predicated region
    $region6: #{tpu_custom_call.1} parent=1 // pred_check
      _
    $region7: #{tpu_custom_call.1} parent=1 // pred_check_branch
      %21 = sbr.rel (0) target = $region9
    $region8: #{tpu_custom_call.1} parent=1 // pred_region
      _
    $region9: #{tpu_custom_call.1} parent=1 // pred_fallthru
      _
    // Predicated region
    $region10: #{tpu_custom_call.1} parent=1 // pred_check
      _
    $region11: #{tpu_custom_call.1} parent=1 // pred_check_branch
      %23 = sbr.rel (0) target = $region13
    $region12: #{tpu_custom_call.1} parent=1 // pred_region
      _
    $region13: #{tpu_custom_call.1} parent=1 // pred_fallthru
      _
    // Predicated region
    $region14: #{tpu_custom_call.1} parent=1 // pred_check
      _
    $region15: #{tpu_custom_call.1} parent=1 // pred_check_branch
      %25 = sbr.rel (0) target = $region17
    $region16: #{tpu_custom_call.1} parent=1 // pred_region
      %26 = dma.done [#allocation4], 16
    $region17: #{tpu_custom_call.1} parent=1 // pred_fallthru
      _
    %27 = sfence
    %s28 = sld [smem:[#allocation2 + $0x1]]
    %v29 = vstv %s28
    %v30 = vrcp.pop %v29
    %s31 = vtos %v30
    %v32 = vld [vmem:[%s1] sm:$0xff]
    %v33 = vmul.f32 %v32, %v32
    %vm34 = vcmask 261120
    %v35 = vsel %vm34, %v33, 0.0
    %36 = vadd.xlane.f32.xlu0 %v35
    %v37 = vpop.xlane.xlu0 %36
    %v38 = vmax.f32 %v37, 1e-24
    %v39 = vrsqrt.pop %v38
    %v40 = vmul.f32 %v32, %v39
    %v41 = vld [vmem:[%s2] sm:$0xff]
    %v42 = vld [vmem:[%s2 + $0x8] sm:$0xff]
    %v43 = vld [vmem:[%s2 + $0x10] sm:$0xff]
    %v44 = vld [vmem:[%s2 + $0x18] sm:$0xff]
    %v45 = vld [vmem:[%s2 + $0x20] sm:$0xff]
    %v46 = vld [vmem:[%s2 + $0x28] sm:$0xff]
    %v47 = vld [vmem:[%s2 + $0x30] sm:$0xff]
    %v48 = vld [vmem:[%s2 + $0x38] sm:$0xff]
    %v49 = vld [vmem:[%s2 + $0x40] sm:$0xff]
    %v50 = vld [vmem:[%s2 + $0x48] sm:$0xff]
    %v51 = vld [vmem:[%s2 + $0x50] sm:$0xff]
    %v52 = vld [vmem:[%s2 + $0x58] sm:$0xff]
    %v53 = vld [vmem:[%s2 + $0x60] sm:$0xff]
    %v54 = vld [vmem:[%s2 + $0x68] sm:$0xff]
    %v55 = vld [vmem:[%s2 + $0x70] sm:$0xff]
    %v56 = vld [vmem:[%s2 + $0x78] sm:$0xff]
    %v57 = vmul.f32 %v41, %v41
    %v58 = vmul.f32 %v42, %v42
    %v59 = vmul.f32 %v43, %v43
    %v60 = vmul.f32 %v44, %v44
    %v61 = vmul.f32 %v45, %v45
    %v62 = vmul.f32 %v46, %v46
    %v63 = vmul.f32 %v47, %v47
    %v64 = vmul.f32 %v48, %v48
    %v65 = vmul.f32 %v49, %v49
    %v66 = vmul.f32 %v50, %v50
    %v67 = vmul.f32 %v51, %v51
    %v68 = vmul.f32 %v52, %v52
    %v69 = vmul.f32 %v53, %v53
    %v70 = vmul.f32 %v54, %v54
    %v71 = vmul.f32 %v55, %v55
    %v72 = vmul.f32 %v56, %v56
    %v73 = vsel %vm34, %v57, 0.0
    %74 = vadd.xlane.f32.xlu0 %v73
    %v75 = vpop.xlane.xlu0 %74
    %v76 = vsel %vm34, %v58, 0.0
    %77 = vadd.xlane.f32.xlu0 %v76
    %v78 = vpop.xlane.xlu0 %77
    %v79 = vsel %vm34, %v59, 0.0
    %80 = vadd.xlane.f32.xlu0 %v79
    %v81 = vpop.xlane.xlu0 %80
    %v82 = vsel %vm34, %v60, 0.0
    %83 = vadd.xlane.f32.xlu0 %v82
    %v84 = vpop.xlane.xlu0 %83
    %v85 = vsel %vm34, %v61, 0.0
    %86 = vadd.xlane.f32.xlu0 %v85
    %v87 = vpop.xlane.xlu0 %86
    %v88 = vsel %vm34, %v62, 0.0
    %89 = vadd.xlane.f32.xlu0 %v88
    %v90 = vpop.xlane.xlu0 %89
    %v91 = vsel %vm34, %v63, 0.0
    %92 = vadd.xlane.f32.xlu0 %v91
    %v93 = vpop.xlane.xlu0 %92
    %v94 = vsel %vm34, %v64, 0.0
    %95 = vadd.xlane.f32.xlu0 %v94
    %v96 = vpop.xlane.xlu0 %95
    %v97 = vsel %vm34, %v65, 0.0
    %98 = vadd.xlane.f32.xlu0 %v97
    %v99 = vpop.xlane.xlu0 %98
    %v100 = vsel %vm34, %v66, 0.0
    %101 = vadd.xlane.f32.xlu0 %v100
    %v102 = vpop.xlane.xlu0 %101
    %v103 = vsel %vm34, %v67, 0.0
    %104 = vadd.xlane.f32.xlu0 %v103
    %v105 = vpop.xlane.xlu0 %104
    %v106 = vsel %vm34, %v68, 0.0
    %107 = vadd.xlane.f32.xlu0 %v106
    %v108 = vpop.xlane.xlu0 %107
    %v109 = vsel %vm34, %v69, 0.0
    %110 = vadd.xlane.f32.xlu0 %v109
    %v111 = vpop.xlane.xlu0 %110
    %v112 = vsel %vm34, %v70, 0.0
    %113 = vadd.xlane.f32.xlu0 %v112
    %v114 = vpop.xlane.xlu0 %113
    %v115 = vsel %vm34, %v71, 0.0
    %116 = vadd.xlane.f32.xlu0 %v115
    %v117 = vpop.xlane.xlu0 %116
    %v118 = vsel %vm34, %v72, 0.0
    %119 = vadd.xlane.f32.xlu0 %v118
    %v120 = vpop.xlane.xlu0 %119
    %v121 = vmax.f32 %v75, 1e-24
    %v122 = vmax.f32 %v78, 1e-24
    %v123 = vmax.f32 %v81, 1e-24
    %v124 = vmax.f32 %v84, 1e-24
    %v125 = vmax.f32 %v87, 1e-24
    %v126 = vmax.f32 %v90, 1e-24
    %v127 = vmax.f32 %v93, 1e-24
    %v128 = vmax.f32 %v96, 1e-24
    %v129 = vmax.f32 %v99, 1e-24
    %v130 = vmax.f32 %v102, 1e-24
    %v131 = vmax.f32 %v105, 1e-24
    %v132 = vmax.f32 %v108, 1e-24
    %v133 = vmax.f32 %v111, 1e-24
    %v134 = vmax.f32 %v114, 1e-24
    %v135 = vmax.f32 %v117, 1e-24
    %v136 = vmax.f32 %v120, 1e-24
    %v137 = vrsqrt.pop %v121
    %v138 = vrsqrt.pop %v122
    %v139 = vrsqrt.pop %v123
    %v140 = vrsqrt.pop %v124
    %v141 = vrsqrt.pop %v125
    %v142 = vrsqrt.pop %v126
    %v143 = vrsqrt.pop %v127
    %v144 = vrsqrt.pop %v128
    %v145 = vrsqrt.pop %v129
    %v146 = vrsqrt.pop %v130
    %v147 = vrsqrt.pop %v131
    %v148 = vrsqrt.pop %v132
    %v149 = vrsqrt.pop %v133
    %v150 = vrsqrt.pop %v134
    %v151 = vrsqrt.pop %v135
    %v152 = vrsqrt.pop %v136
    %v153 = vmul.f32 %v41, %v137
    %v154 = vmul.f32 %v42, %v138
    %v155 = vmul.f32 %v43, %v139
    %v156 = vmul.f32 %v44, %v140
    %v157 = vmul.f32 %v45, %v141
    %v158 = vmul.f32 %v46, %v142
    %v159 = vmul.f32 %v47, %v143
    %v160 = vmul.f32 %v48, %v144
    %v161 = vmul.f32 %v49, %v145
    %v162 = vmul.f32 %v50, %v146
    %v163 = vmul.f32 %v51, %v147
    %v164 = vmul.f32 %v52, %v148
    %v165 = vmul.f32 %v53, %v149
    %v166 = vmul.f32 %v54, %v150
    %v167 = vmul.f32 %v55, %v151
    %v168 = vmul.f32 %v56, %v152
    %v170 = vsel %vm34, %v40, 0
    %v173 = vsel %vm34, %v153, 0
    %v176 = vsel %vm34, %v154, 0
    %v179 = vsel %vm34, %v155, 0
    %v182 = vsel %vm34, %v156, 0
    %v185 = vsel %vm34, %v157, 0
    %v188 = vsel %vm34, %v158, 0
    %v191 = vsel %vm34, %v159, 0
    %v194 = vsel %vm34, %v160, 0
    %v197 = vsel %vm34, %v161, 0
    %v200 = vsel %vm34, %v162, 0
    %v203 = vsel %vm34, %v163, 0
    %v206 = vsel %vm34, %v164, 0
    %v209 = vsel %vm34, %v165, 0
    %v212 = vsel %vm34, %v166, 0
    %v215 = vsel %vm34, %v167, 0
    %v218 = vsel %vm34, %v168, 0
    %220 = vmatprep.subr.mxu0 0.0
    %221 = vmatpush1.xpose.msra.mxu0 %v173
    %222 = vmatprep.subr.mxu0 0.0
    %223 = vmatpush1.xpose.msra.mxu0 %v176
    %224 = vmatprep.subr.mxu0 0.0
    %225 = vmatpush1.xpose.msra.mxu0 %v179
    %226 = vmatprep.subr.mxu0 0.0
    %227 = vmatpush1.xpose.msra.mxu0 %v182
    %228 = vmatprep.subr.mxu0 0.0
    %229 = vmatpush1.xpose.msra.mxu0 %v185
    %230 = vmatprep.subr.mxu0 0.0
    %231 = vmatpush1.xpose.msra.mxu0 %v188
    %232 = vmatprep.subr.mxu0 0.0
    %233 = vmatpush1.xpose.msra.mxu0 %v191
    %234 = vmatprep.subr.mxu0 0.0
    %235 = vmatpush1.xpose.msra.mxu0 %v194
    %236 = vmatprep.subr.mxu0 0.0
    %237 = vmatpush1.xpose.msra.mxu0 %v197
    %238 = vmatprep.subr.mxu0 0.0
    %239 = vmatpush1.xpose.msra.mxu0 %v200
    %240 = vmatprep.subr.mxu0 0.0
    %241 = vmatpush1.xpose.msra.mxu0 %v203
    %242 = vmatprep.subr.mxu0 0.0
    %243 = vmatpush1.xpose.msra.mxu0 %v206
    %244 = vmatprep.subr.mxu0 0.0
    %245 = vmatpush1.xpose.msra.mxu0 %v209
    %246 = vmatprep.subr.mxu0 0.0
    %247 = vmatpush1.xpose.msra.mxu0 %v212
    %248 = vmatprep.subr.mxu0 0.0
    %249 = vmatpush1.xpose.msra.mxu0 %v215
    %250 = vmatprep.subr.mxu0 0.0
    %251 = vmatpush1.xpose.msra.mxu0 %v218
    %252 = vmatprep.subr.mxu0 0.0
    %253 = vmatpush1.xpose.msra.mxu0 0.0
    %254 = vmatprep.subr.mxu0 0.0
    %255 = vmatpush1.xpose.msra.mxu0 0.0
    %256 = vmatprep.subr.mxu0 0.0
    %257 = vmatpush1.xpose.msra.mxu0 0.0
    %258 = vmatprep.subr.mxu0 0.0
    %259 = vmatpush1.xpose.msra.mxu0 0.0
    %260 = vmatprep.subr.mxu0 0.0
    %261 = vmatpush1.xpose.msra.mxu0 0.0
    %262 = vmatprep.subr.mxu0 0.0
    %263 = vmatpush1.xpose.msra.mxu0 0.0
    %264 = vmatprep.subr.mxu0 0.0
    %265 = vmatpush1.xpose.msra.mxu0 0.0
    %266 = vmatprep.subr.mxu0 0.0
    %267 = vmatpush1.xpose.msra.mxu0 0.0
    %268 = vmatprep.subr.mxu0 0.0
    %269 = vmatpush1.xpose.msra.mxu0 0.0
    %270 = vmatprep.subr.mxu0 0.0
    %271 = vmatpush1.xpose.msra.mxu0 0.0
    %272 = vmatprep.subr.mxu0 0.0
    %273 = vmatpush1.xpose.msra.mxu0 0.0
    %274 = vmatprep.subr.mxu0 0.0
    %275 = vmatpush1.xpose.msra.mxu0 0.0
    %276 = vmatprep.subr.mxu0 0.0
    %277 = vmatpush1.xpose.msra.mxu0 0.0
    %278 = vmatprep.subr.mxu0 0.0
    %279 = vmatpush1.xpose.msra.mxu0 0.0
    %280 = vmatprep.subr.mxu0 0.0
    %281 = vmatpush1.xpose.msra.mxu0 0.0
    %282 = vmatprep.subr.mxu0 0.0
    %283 = vmatpush1.xpose.msra.mxu0 0.0
    %284 = vmatprep.mubr.f32.mxu0 0.0
    %285 = vmatmul.mubr.f32.gmra.mrb[0].mxu0 %v170
    %v286 = vpop.f32.mrb[0].mxu0
    %v287 = vadd.f32 0.0, %v286
    %v288 = vpop.f32.mrb[0].mxu0
    %289 = vdwg.mxu0
    %v290 = vstv %s31
    %v291 = vmul.f32 %v287, %v290
    %v292 = vmul.f32 %v291, 1.442695
    %v293 = vpow.pop %v292
    %294 = vst [vmem:[#allocation5] sm:$0xff] %v293
    // Predicated region
    $region18: #{tpu_custom_call.1} parent=1 // pred_check
      _
    $region19: #{tpu_custom_call.1} parent=1 // pred_check_branch
      %296 = sbr.rel (0) target = $region21
    $region20: #{tpu_custom_call.1} parent=1 // pred_region
      %s298 = ssub.s32 128, 128
      %299 = vsyncadd [#allocation3], %s298
      %s301 = sshll.u32 [#allocation5], 4
      %s302 = int_to_ptr.vmem [resolvable:$true] %s301
      %304 = dma.vmem_to_hbm [thread:$0]  %s302, 128, %s3, [#allocation3]
    $region21: #{tpu_custom_call.1} parent=1 // pred_fallthru
      _
    // Predicated region
    $region22: #{tpu_custom_call.1} parent=1 // pred_check
      _
    $region23: #{tpu_custom_call.1} parent=1 // pred_check_branch
      %306 = sbr.rel (0) target = $region25
    $region24: #{tpu_custom_call.1} parent=1 // pred_region
      %307 = dma.done [#allocation3], 128
    $region25: #{tpu_custom_call.1} parent=1 // pred_fallthru
      _
    %308 = vsyncpa [#allocation3], 1
    %309 = vsyncpa [#allocation4], 1

</llo_original>
